<compile_context>
chip_gen: v7x
topology: tpu7x:2x2x1
jax: 0.10.0
libtpu: 0.0.40
codegen_flags: <defaults>
</compile_context>

<pallas_src>
import jax
import jax.numpy as jnp
from jax.experimental import pallas as pl
from jax.experimental.pallas import tpu as pltpu


def _ceil_div(a, b):
    return -(-a // b)


def _physical_vmem_bytes():
    """Per-core VMEM capacity; conservative v7x-class fallback if unknown."""
    try:
        v = int(pltpu.get_tpu_info().vmem_capacity_bytes)
        if v >= (16 << 20):
            return v
    except Exception:
        pass
    return 64 << 20


_PHYS_VMEM = _physical_vmem_bytes()
_VMEM_BUDGET = (3 * _PHYS_VMEM) // 8     # kernel-resident working-set target
_VMEM_LIMIT = _PHYS_VMEM // 2            # scoped-VMEM limit handed to Mosaic


def _choose_tb(B, N, Fin, Fout, op_bytes, target_rows, vmem_budget):
    """Sets per grid step.

    Fill >= target_rows MXU rows per step (amortizes the ~0.35 us per-step
    pipeline overhead), stay inside the per-generation VMEM budget counting
    everything resident (double-buffered activations, double-buffered weight
    blocks, bias, f32 intermediates), keep >= 2 grid steps when B >= 2 so the
    "parallel" axis can shard across v7x's 2 TensorCores, and minimize the
    boundary-block remainder.
    """
    # TB-independent residents: two weight blocks (assume double-buffered) + bias.
    fixed = 2 * (2 * Fin * Fout * op_bytes) + 2 * Fout * 4
    avail = max(vmem_budget - fixed, 1 << 20)
    # Per-set bytes: 2x-buffered input tile + 2x-buffered f32 output tile
    # + f32 matmul-result / epilogue intermediates (compiler scratch estimate).
    per_set = N * (2 * Fin * op_bytes + 2 * Fout * 4 + 2 * Fout * 4)
    tb_cap = max(1, avail // per_set)

    tb = max(1, _ceil_div(target_rows, N))
    tb = min(tb, tb_cap)
    if B >= 2:
        tb = min(tb, _ceil_div(B, 2))            # >= 2 grid steps (v7x parity)
    tb = max(1, min(tb, B))
    num_blocks = _ceil_div(B, tb)
    tb = _ceil_div(B, num_blocks)                # minimize boundary remainder
    return tb, num_blocks


def deepset_kernel(x_ref, wsum_ref, w2_ref, bsum_ref, o_ref):
    # x_ref: (TB, N, Fin) operand dtype; weights (Fin, Fout) operand dtype;
    # bias (1, Fout) f32; o_ref: (TB, N, Fout) output dtype.
    tb, n, fin = x_ref.shape
    fout = o_ref.shape[-1]

    x = x_ref[...]
    # Mailbox mean = per-set mean of node features (fully-connected set graph).
    # Reduce in f32 regardless of operand dtype (v5e has no bf16 VPU/XLU path).
    mean = jnp.mean(x.astype(jnp.float32), axis=1)            # (TB, Fin) f32

    # One fused MXU matmul over all TB*N node rows. N is a multiple of the
    # sublane pack (8 for f32, 16 for bf16), so the reshape is layout-free.
    y = jnp.dot(x.reshape(tb * n, fin), wsum_ref[...],
                preferred_element_type=jnp.float32)            # (TB*N, Fout)
    # Tiny matmul on the TB per-set means (~1/N of the MXU work).
    m = jnp.dot(mean.astype(w2_ref.dtype), w2_ref[...],
                preferred_element_type=jnp.float32)            # (TB, Fout)

    # f32 epilogue, single cast at the final store.
    out = y.reshape(tb, n, fout) + bsum_ref[...] - m[:, None, :]
    o_ref[...] = out.astype(o_ref.dtype)


def deepset_layer(x, w1_t, b1, w2_t, b2, *, target_rows=2048, use_bf16=None):
    """x: [B, N, Fin]; w*_t: [Fin, Fout]; b*: [Fout]. Returns [B, N, Fout]."""
    B, N, Fin = x.shape
    Fout = w1_t.shape[1]
    out_dtype = x.dtype

    # --- algebraic fusion (one-time XLA ops) -------------------------------
    w_sum = w1_t + w2_t                               # (Fin, Fout)
    w2_op = w2_t
    b_sum = (b1 + b2).astype(jnp.float32).reshape(1, Fout)

    # --- bf16 MXU operands for large feature dims --------------------------
    # Only when the (TB*N, Fin) reshape stays packing-boundary free (N % 16).
    if use_bf16 is None:
        use_bf16 = (x.dtype == jnp.float32 and Fin >= 256 and Fout >= 256
                    and N % 16 == 0)
    if use_bf16:
        x_op = x.astype(jnp.bfloat16)
        w_sum = w_sum.astype(jnp.bfloat16)
        w2_op = w2_op.astype(jnp.bfloat16)
    else:
        x_op = x
    op_bytes = jnp.dtype(x_op.dtype).itemsize
    out_bytes = jnp.dtype(out_dtype).itemsize

    # --- tile selection -----------------------------------------------------
    TB, num_blocks = _choose_tb(B, N, Fin, Fout, op_bytes, target_rows,
                                _VMEM_BUDGET)

    cost = pl.CostEstimate(
        flops=2 * B * N * Fin * Fout + 2 * B * Fin * Fout,
        transcendentals=0,
        bytes_accessed=(B * N * Fin * op_bytes          # x
                        + 2 * Fin * Fout * op_bytes     # fused + W2 weights
                        + Fout * 4                      # bias
                        + B * N * Fout * out_bytes),    # output
    )

    grid_spec = pltpu.PrefetchScalarGridSpec(
        num_scalar_prefetch=0,
        grid=(num_blocks,),
        in_specs=[
            # x: full-extent (N, Fin) in the last two dims => no padding, no
            # extra HBM copy; ragged last B-block handled by Pallas masking.
            pl.BlockSpec((TB, N, Fin), lambda b: (b, 0, 0)),
            # Grid-invariant weight / bias blocks: constant index_map => never
            # re-DMA'd across grid steps.
            pl.BlockSpec((Fin, Fout), lambda b: (0, 0)),
            pl.BlockSpec((Fin, Fout), lambda b: (0, 0)),
            pl.BlockSpec((1, Fout), lambda b: (0, 0)),
        ],
        out_specs=pl.BlockSpec((TB, N, Fout), lambda b: (b, 0, 0)),
    )

    out = pl.pallas_call(
        deepset_kernel,
        out_shape=jax.ShapeDtypeStruct((B, N, Fout), out_dtype),
        grid_spec=grid_spec,
        compiler_params=pltpu.CompilerParams(
            dimension_semantics=("parallel",),
            vmem_limit_bytes=_VMEM_LIMIT),
        cost_estimate=cost,
    )(x_op, w_sum, w2_op, b_sum)

    return out


def deepset_ref(x, w1_t, b1, w2_t, b2):
    mean = jnp.mean(x, axis=1, keepdims=True)
    return (x @ w1_t + b1) + ((x - mean) @ w2_t + b2)


def _run_case(key, B, N, Fin, Fout, *, atol=1e-4, rtol=1e-4, use_bf16=None):
    k_x, k_w1, k_b1, k_w2, k_b2 = jax.random.split(key, 5)
    x = jax.random.normal(k_x, (B, N, Fin), dtype=jnp.float32)

    # PyTorch Linear stores W as [Fout, Fin]; the layer takes W.T.
    bound = 1.0 / (Fin ** 0.5)
    w1 = jax.random.uniform(k_w1, (Fout, Fin), minval=-bound, maxval=bound)
    b1 = jax.random.uniform(k_b1, (Fout,), minval=-bound, maxval=bound)
    w2 = jax.random.uniform(k_w2, (Fout, Fin), minval=-bound, maxval=bound)
    b2 = jax.random.uniform(k_b2, (Fout,), minval=-bound, maxval=bound)

    out = deepset_layer(x, w1.T, b1, w2.T, b2, use_bf16=use_bf16)
    out = jax.block_until_ready(out)

    ref = deepset_ref(x, w1.T, b1, w2.T, b2)
    assert out.shape == (B, N, Fout)
    assert out.dtype == x.dtype
    max_err = float(jnp.max(jnp.abs(out - ref)))
    assert jnp.allclose(out, ref, atol=atol, rtol=rtol), (
        f"mismatch vs reference (max |err| = {max_err})")


if __name__ == "__main__":
    key = jax.random.PRNGKey(0)
    k1, k2, k3 = jax.random.split(key, 3)

    # f32, tiny feature dims: full-extent (unpadded) K=Fin=32 and a masked-vst
    # Fout=32 output; B=2 -> two grid steps (one per v7x TensorCore).
    _run_case(k1, B=2, N=8, Fin=32, Fout=32)
    # f32, B=3 with TB=2: exercises the non-divisible boundary block (Pallas
    # masks the out-of-range set; no wrapper-side pad / post-slice copies).
    _run_case(k2, B=3, N=8, Fin=32, Fout=32)
    # Larger feature dims, N % 16 == 0: auto bf16 MXU operands with f32
    # accumulation and f32 epilogue; looser tolerance for bf16 operand rounding.
    _run_case(k3, B=4, N=16, Fin=256, Fout=256, atol=5e-2, rtol=5e-2)

    print("KERNEL_OK")
</pallas_src>

<mosaic_0001>
module attributes {stable_mosaic.version = 11 : i64} {
  func.func @deepset_kernel(%arg0: i32, %arg1: memref<1x8x32xf32, #tpu.memory_space<vmem>>, %arg2: memref<32x32xf32, #tpu.memory_space<vmem>>, %arg3: memref<32x32xf32, #tpu.memory_space<vmem>>, %arg4: memref<1x32xf32, #tpu.memory_space<vmem>>, %arg5: memref<1x8x32xf32, #tpu.memory_space<vmem>>) attributes {dimension_semantics = [#tpu.dimension_semantics<parallel>], iteration_bounds = array<i64: 2>, scalar_prefetch = 0 : i64, scratch_operands = 0 : i64, tpu.core_type = #tpu.core_type<tc>, window_params = [{transform_indices = @transform_0, window_bounds = array<i64: 1, 8, 32>}, {pipeline_mode = #tpu.pipeline_mode<synchronous>, transform_indices = @transform_1, window_bounds = array<i64: 32, 32>}, {pipeline_mode = #tpu.pipeline_mode<synchronous>, transform_indices = @transform_2, window_bounds = array<i64: 32, 32>}, {pipeline_mode = #tpu.pipeline_mode<synchronous>, transform_indices = @transform_3, window_bounds = array<i64: 1, 32>}, {transform_indices = @transform_4, window_bounds = array<i64: 1, 8, 32>}]} {
    %c0 = arith.constant 0 : index
    %c0_0 = arith.constant 0 : index
    %c0_1 = arith.constant 0 : index
    %0 = vector.load %arg1[%c0, %c0_0, %c0_1] : memref<1x8x32xf32, #tpu.memory_space<vmem>>, vector<1x8x32xf32>
    %cst = arith.constant dense<0.000000e+00> : vector<1x32xf32>
    %1 = vector.multi_reduction <add>, %0, %cst [1] : vector<1x8x32xf32> to vector<1x32xf32>
    %cst_2 = arith.constant 8.000000e+00 : f32
    %2 = vector.broadcast %cst_2 : f32 to vector<1x32xf32>
    %3 = arith.divf %1, %2 : vector<1x32xf32>
    %4 = vector.shape_cast %0 : vector<1x8x32xf32> to vector<8x32xf32>
    %c0_3 = arith.constant 0 : index
    %c0_4 = arith.constant 0 : index
    %5 = vector.load %arg2[%c0_3, %c0_4] : memref<32x32xf32, #tpu.memory_space<vmem>>, vector<32x32xf32>
    %cst_5 = arith.constant dense<0.000000e+00> : vector<8x32xf32>
    %6 = tpu.matmul %4, %5, %cst_5 {dimension_numbers = #tpu.dot_dimension_numbers<[1], [0], [0], [1], [0, 0, 1, 1], [], []>} : vector<8x32xf32>, vector<32x32xf32>, vector<8x32xf32> -> vector<8x32xf32>
    %c0_6 = arith.constant 0 : index
    %c0_7 = arith.constant 0 : index
    %7 = vector.load %arg3[%c0_6, %c0_7] : memref<32x32xf32, #tpu.memory_space<vmem>>, vector<32x32xf32>
    %cst_8 = arith.constant dense<0.000000e+00> : vector<1x32xf32>
    %8 = tpu.matmul %3, %7, %cst_8 {dimension_numbers = #tpu.dot_dimension_numbers<[1], [0], [0], [1], [0, 0, 1, 1], [], []>} : vector<1x32xf32>, vector<32x32xf32>, vector<1x32xf32> -> vector<1x32xf32>
    %9 = vector.shape_cast %6 : vector<8x32xf32> to vector<1x8x32xf32>
    %c0_9 = arith.constant 0 : index
    %c0_10 = arith.constant 0 : index
    %10 = vector.load %arg4[%c0_9, %c0_10] : memref<1x32xf32, #tpu.memory_space<vmem>>, vector<1x32xf32>
    %11 = vector.shape_cast %10 : vector<1x32xf32> to vector<1x1x32xf32>
    %12 = vector.broadcast %11 : vector<1x1x32xf32> to vector<1x8x32xf32>
    %13 = arith.addf %9, %12 : vector<1x8x32xf32>
    %14 = vector.shape_cast %8 : vector<1x32xf32> to vector<1x1x32xf32>
    %15 = vector.broadcast %14 : vector<1x1x32xf32> to vector<1x8x32xf32>
    %16 = arith.subf %13, %15 : vector<1x8x32xf32>
    %c0_11 = arith.constant 0 : index
    %c0_12 = arith.constant 0 : index
    %c0_13 = arith.constant 0 : index
    %17 = vector.load %arg5[%c0_11, %c0_12, %c0_13] : memref<1x8x32xf32, #tpu.memory_space<vmem>>, vector<1x8x32xf32>
    tpu.vector_store %arg5[%c0_11, %c0_12, %c0_13], %16 {strides = array<i32>} : memref<1x8x32xf32, #tpu.memory_space<vmem>>, vector<1x8x32xf32>,
    return
  }
  func.func @transform_0(%arg0: i32) -> (i32, i32, i32) {
    %c0_i32 = arith.constant 0 : i32
    %c0_i32_0 = arith.constant 0 : i32
    %c0_i32_1 = arith.constant 0 : i32
    return %arg0, %c0_i32, %c0_i32_0 : i32, i32, i32
  }
  func.func @transform_1(%arg0: i32) -> (i32, i32) {
    %c0_i32 = arith.constant 0 : i32
    %c0_i32_0 = arith.constant 0 : i32
    %c0_i32_1 = arith.constant 0 : i32
    return %c0_i32, %c0_i32_0 : i32, i32
  }
  func.func @transform_2(%arg0: i32) -> (i32, i32) {
    %c0_i32 = arith.constant 0 : i32
    %c0_i32_0 = arith.constant 0 : i32
    %c0_i32_1 = arith.constant 0 : i32
    return %c0_i32, %c0_i32_0 : i32, i32
  }
  func.func @transform_3(%arg0: i32) -> (i32, i32) {
    %c0_i32 = arith.constant 0 : i32
    %c0_i32_0 = arith.constant 0 : i32
    %c0_i32_1 = arith.constant 0 : i32
    return %c0_i32, %c0_i32_0 : i32, i32
  }
  func.func @transform_4(%arg0: i32) -> (i32, i32, i32) {
    %c0_i32 = arith.constant 0 : i32
    %c0_i32_0 = arith.constant 0 : i32
    %c0_i32_1 = arith.constant 0 : i32
    return %arg0, %c0_i32, %c0_i32_0 : i32, i32, i32
  }
}

</mosaic_0001>

<llo_original>
// kernel: tpu_custom_call.1
$region0: #{tpu_custom_call.1}
  #allocation0 [shape = 'u32[]', space=smem, size = 0x4, offset = 0x4, fixed_abs, tag = 'smem constant byte address 0x4 - core index']
  #allocation1 [shape = 'u32[144,128]{1,0:T(1,128)}', space=vmem, size = 0x12000, scoped, tag = 'internal scratch']
  %s0 = inlined_call_operand.hbm [shape: f32[2,8,32], index: 0, kind: input, shape index: {}]
  %s1 = inlined_call_operand.hbm [shape: f32[32,32], index: 1, kind: input, shape index: {}]
  %s2 = inlined_call_operand.hbm [shape: f32[32,32], index: 2, kind: input, shape index: {}]
  %s3 = inlined_call_operand.vmem [shape: f32[1,32], index: 3, kind: input, shape index: {}]
  %s4 = inlined_call_operand.hbm [shape: f32[2,8,32], index: 4, kind: output, shape index: {}]
  %s5 = sld [smem:[#allocation0]]
  $region61: #{tpu_custom_call.1} parent=0
    _
  %s7 = ssub.s32 1, %s5
  %s8 = scalar_select 0, %s7, %s5
  $region1: #{tpu_custom_call.1} parent=0
    #allocation2 [shape = 'u8[8192]{0}', space=vmem, size = 0x2000, scoped, tag = 'input window, operand 0']
    #allocation3 [shape = 's32[2]{0}', space=sflag, size = 0x8, scoped, tag = 'scoped memory for tpu_custom_call.1']
    #allocation4 [shape = 's32[2]{0}', space=sflag, size = 0x8, scoped, tag = 'scoped memory for tpu_custom_call.1']
    #allocation5 [shape = 'u8[16384]{0}', space=vmem, size = 0x4000, scoped, tag = 'input window, operand 1, single buffered']
    #allocation6 [shape = 's32[1]{0}', space=sflag, size = 0x4, scoped, tag = 'scoped memory for tpu_custom_call.1']
    #allocation7 [shape = 'u8[16384]{0}', space=vmem, size = 0x4000, scoped, tag = 'input window, operand 2, single buffered']
    #allocation8 [shape = 'u8[8192]{0}', space=vmem, size = 0x2000, scoped, tag = 'output window, operand 0']
    %9 = vsyncpa [#allocation3], 0
    %s10 = scalar_lea.sflag [#allocation3], 1
    %11 = vsyncpa %s10, 0
    %12 = vsyncpa [#allocation6], 0
    %13 = vsyncpa [#allocation4], 0
    %s14 = scalar_lea.sflag [#allocation4], 1
    %15 = vsyncpa %s14, 0
    loop: start=0, step=1, limit=4
    $region2: #{tpu_custom_call.1} parent=1 // loop_pre_header
      _
    $region3: #{tpu_custom_call.1} parent=1 // loop_header
      %s17 = sphi 0, %s21
      %p18 = scmp.ge.s32.totalorder %s17, 4
      %s27 = sphi 0, %s29
      %s30 = sphi 0, %s27
      %s31 = sphi 0, %s30
      %s47 = sphi 0, %s31
      %s51 = sphi 0, %s51
      %s53 = sphi 0, %s51
      %s54 = sphi 0, %s53
      %s68 = sphi 0, %s54
      %s72 = sphi 0, %s72
      %s74 = sphi 0, %s72
      %s75 = sphi 0, %s74
      %s89 = sphi 0, %s75
      %s93 = sphi 0, %s93
      %s95 = sphi 0, %s93
      %s96 = sphi 0, %s95
      %s110 = sphi 0, %s96
      %s116 = sphi 0, %s118
      %s119 = sphi 0, %s116
      %s120 = sphi 0, %s119
      %s136 = sphi 0, %s120
    $region4: #{tpu_custom_call.1} parent=1 // loop_header_branch
      %20 = sbr.rel (%p18) target = $region8
    $region5: #{tpu_custom_call.1} parent=1 // loop_body
      %s22 = ssub.s32 %s17, 1
      %s23 = ssub.s32 %s17, 2
      %s24 = sadd.s32 %s17, 1
      %s25 = ssub.s32 %s17, %s24
      %p26 = scmp.eq.s32.totalorder %s25, 0
      %s28 = sadd.s32 %s27, 1
      %s29 = scalar_select %p26, %s27, %s28
      %p32 = pneg %p26
      %p33 = scmp.eq.s32.totalorder %s17, 1
      %p34 = por %p32, %p33
      %p35 = scmp.ne.s32.totalorder %s27, %s30
      %p36 = scmp.eq.s32.totalorder %s17, 0
      %p37 = por %p35, %p36
      %p38 = scmp.ne.s32.totalorder %s27, %s30
      %p39 = scmp.eq.s32.totalorder %s22, 1
      %p40 = por %p38, %p39
      %p41 = scmp.ne.s32.totalorder %s30, %s31
      %p42 = scmp.eq.s32.totalorder %s22, 0
      %p43 = por %p41, %p42
      %p44 = scmp.ne.s32.totalorder %s30, %s31
      %p45 = scmp.eq.s32.totalorder %s23, 1
      %p46 = por %p44, %p45
      %p48 = scmp.ne.s32.totalorder %s31, %s47
      %p49 = scmp.eq.s32.totalorder %s23, 0
      %p50 = por %p48, %p49
      %s52 = sadd.s32 %s51, 1
      %p55 = scmp.eq.s32.totalorder %s17, 1
      %p56 = scmp.ne.s32.totalorder %s51, %s53
      %p57 = scmp.eq.s32.totalorder %s17, 0
      %p58 = por %p56, %p57
      %p59 = scmp.ne.s32.totalorder %s51, %s53
      %p60 = scmp.eq.s32.totalorder %s22, 1
      %p61 = por %p59, %p60
      %p62 = scmp.ne.s32.totalorder %s53, %s54
      %p63 = scmp.eq.s32.totalorder %s22, 0
      %p64 = por %p62, %p63
      %p65 = scmp.ne.s32.totalorder %s53, %s54
      %p66 = scmp.eq.s32.totalorder %s23, 1
      %p67 = por %p65, %p66
      %p69 = scmp.ne.s32.totalorder %s54, %s68
      %p70 = scmp.eq.s32.totalorder %s23, 0
      %p71 = por %p69, %p70
      %s73 = sadd.s32 %s72, 1
      %p76 = scmp.eq.s32.totalorder %s17, 1
      %p77 = scmp.ne.s32.totalorder %s72, %s74
      %p78 = scmp.eq.s32.totalorder %s17, 0
      %p79 = por %p77, %p78
      %p80 = scmp.ne.s32.totalorder %s72, %s74
      %p81 = scmp.eq.s32.totalorder %s22, 1
      %p82 = por %p80, %p81
      %p83 = scmp.ne.s32.totalorder %s74, %s75
      %p84 = scmp.eq.s32.totalorder %s22, 0
      %p85 = por %p83, %p84
      %p86 = scmp.ne.s32.totalorder %s74, %s75
      %p87 = scmp.eq.s32.totalorder %s23, 1
      %p88 = por %p86, %p87
      %p90 = scmp.ne.s32.totalorder %s75, %s89
      %p91 = scmp.eq.s32.totalorder %s23, 0
      %p92 = por %p90, %p91
      %s94 = sadd.s32 %s93, 1
      %p97 = scmp.eq.s32.totalorder %s17, 1
      %p98 = scmp.ne.s32.totalorder %s93, %s95
      %p99 = scmp.eq.s32.totalorder %s17, 0
      %p100 = por %p98, %p99
      %p101 = scmp.ne.s32.totalorder %s93, %s95
      %p102 = scmp.eq.s32.totalorder %s22, 1
      %p103 = por %p101, %p102
      %p104 = scmp.ne.s32.totalorder %s95, %s96
      %p105 = scmp.eq.s32.totalorder %s22, 0
      %p106 = por %p104, %p105
      %p107 = scmp.ne.s32.totalorder %s95, %s96
      %p108 = scmp.eq.s32.totalorder %s23, 1
      %p109 = por %p107, %p108
      %p111 = scmp.ne.s32.totalorder %s96, %s110
      %p112 = scmp.eq.s32.totalorder %s23, 0
      %p113 = por %p111, %p112
      %s114 = ssub.s32 %s17, %s24
      %p115 = scmp.eq.s32.totalorder %s114, 0
      %s117 = sadd.s32 %s116, 1
      %s118 = scalar_select %p115, %s116, %s117
      %p121 = pneg %p115
      %p122 = scmp.eq.s32.totalorder %s17, 1
      %p123 = por %p121, %p122
      %p124 = scmp.ne.s32.totalorder %s116, %s119
      %p125 = scmp.eq.s32.totalorder %s17, 0
      %p126 = por %p124, %p125
      %p127 = scmp.ne.s32.totalorder %s116, %s119
      %p128 = scmp.eq.s32.totalorder %s22, 1
      %p129 = por %p127, %p128
      %p130 = scmp.ne.s32.totalorder %s119, %s120
      %p131 = scmp.eq.s32.totalorder %s22, 0
      %p132 = por %p130, %p131
      %p133 = scmp.ne.s32.totalorder %s119, %s120
      %p134 = scmp.eq.s32.totalorder %s23, 1
      %p135 = por %p133, %p134
      %p137 = scmp.ne.s32.totalorder %s120, %s136
      %p138 = scmp.eq.s32.totalorder %s23, 0
      %p139 = por %p137, %p138
      %p140 = scmp.le.s32.totalorder 1, %s17
      %p141 = scmp.lt.s32.totalorder %s17, 3
      %p142 = pnand %p140, %p141
      %p143 = pneg %p142
      // Predicated region
      $region9: #{tpu_custom_call.1} parent=5 // pred_check
        _
      $region10: #{tpu_custom_call.1} parent=5 // pred_check_branch
        %145 = sbr.rel (%p142) target = $region12
      $region11: #{tpu_custom_call.1} parent=5 // pred_region
        %s146 = ssub.s32 %s17, 1
        // Predicated region
        $region13: #{tpu_custom_call.1} parent=11 // pred_check
          %p147 = pneg %p64
        $region14: #{tpu_custom_call.1} parent=11 // pred_check_branch
          %149 = sbr.rel (%p147) target = $region16
        $region15: #{tpu_custom_call.1} parent=11 // pred_region
          %s151 = ssub.s32 512, 512
          %152 = vsyncadd [#allocation6], %s151
          %s153 = sshll.u32 [#allocation5], 4
          %s154 = int_to_ptr.vmem [resolvable:$true] %s153
          %159 = dma.hbm_to_vmem [thread:$0]  %s1, 512, %s154, [#allocation6], 128, 128, 8
        $region16: #{tpu_custom_call.1} parent=11 // pred_fallthru
          _
        // Predicated region
        $region17: #{tpu_custom_call.1} parent=11 // pred_check
          %p160 = pneg %p85
        $region18: #{tpu_custom_call.1} parent=11 // pred_check_branch
          %162 = sbr.rel (%p160) target = $region20
        $region19: #{tpu_custom_call.1} parent=11 // pred_region
          %s164 = ssub.s32 512, 512
          %165 = vsyncadd [#allocation6], %s164
          %s166 = sshll.u32 [#allocation7], 4
          %s167 = int_to_ptr.vmem [resolvable:$true] %s166
          %172 = dma.hbm_to_vmem [thread:$0]  %s2, 512, %s167, [#allocation6], 128, 128, 8
        $region20: #{tpu_custom_call.1} parent=11 // pred_fallthru
          _
        // Predicated region
        $region21: #{tpu_custom_call.1} parent=11 // pred_check
          %p173 = pneg %p106
        $region22: #{tpu_custom_call.1} parent=11 // pred_check_branch
          %175 = sbr.rel (%p173) target = $region24
        $region23: #{tpu_custom_call.1} parent=11 // pred_region
          _
        $region24: #{tpu_custom_call.1} parent=11 // pred_fallthru
          _
      $region12: #{tpu_custom_call.1} parent=5 // pred_fallthru
        _
      %p176 = scmp.lt.s32.totalorder %s17, 2
      // Predicated region
      $region25: #{tpu_custom_call.1} parent=5 // pred_check
        %p177 = pneg %p176
      $region26: #{tpu_custom_call.1} parent=5 // pred_check_branch
        %179 = sbr.rel (%p177) target = $region28
      $region27: #{tpu_custom_call.1} parent=5 // pred_region
        // Predicated region
        $region29: #{tpu_custom_call.1} parent=27 // pred_check
          %p180 = pneg %p37
        $region30: #{tpu_custom_call.1} parent=27 // pred_check_branch
          %182 = sbr.rel (%p180) target = $region32
        $region31: #{tpu_custom_call.1} parent=27 // pred_region
          %s183 = sand.u32 %s27, 1
          %s184 = scalar_lea.sflag [#allocation3], %s183
          %s185 = sand.u32 %s27, 1
          %s186 = smul.addr %s185, 8
          %s187 = scalar_lea.vmem [#allocation2], %s186
          %s189 = ssub.s32 128, 128
          %190 = vsyncadd %s184, %s189
          %s191 = smul.addr %s17, 128
          %s192 = scalar_lea.hbm %s0, %s191
          %s194 = sshll.u32 %s187, 4
          %s195 = int_to_ptr.vmem [resolvable:$true] %s194
          %197 = dma.hbm_to_vmem [thread:$0]  %s192, 128, %s195, %s184
        $region32: #{tpu_custom_call.1} parent=27 // pred_fallthru
          _
      $region28: #{tpu_custom_call.1} parent=5 // pred_fallthru
        _
      %p198 = scmp.le.s32.totalorder 1, %s17
      %p199 = scmp.lt.s32.totalorder %s17, 3
      %p200 = pnand %p198, %p199
      %p201 = pneg %p200
      // Predicated region
      $region33: #{tpu_custom_call.1} parent=5 // pred_check
        _
      $region34: #{tpu_custom_call.1} parent=5 // pred_check_branch
        %203 = sbr.rel (%p200) target = $region36
      $region35: #{tpu_custom_call.1} parent=5 // pred_region
        %s204 = ssub.s32 %s17, 1
        %s205 = sand.u32 %s30, 1
        %s206 = scalar_lea.sflag [#allocation3], %s205
        %s207 = sand.u32 %s30, 1
        %s208 = smul.addr %s207, 8
        %s209 = scalar_lea.vmem [#allocation2], %s208
        // Predicated region
        $region37: #{tpu_custom_call.1} parent=35 // pred_check
          %p210 = pneg %p43
        $region38: #{tpu_custom_call.1} parent=35 // pred_check_branch
          %212 = sbr.rel (%p210) target = $region40
        $region39: #{tpu_custom_call.1} parent=35 // pred_region
          %213 = dma.done %s206, 128
        $region40: #{tpu_custom_call.1} parent=35 // pred_fallthru
          _
        // Predicated region
        $region41: #{tpu_custom_call.1} parent=35 // pred_check
          %p214 = pneg %p64
        $region42: #{tpu_custom_call.1} parent=35 // pred_check_branch
          %216 = sbr.rel (%p214) target = $region44
        $region43: #{tpu_custom_call.1} parent=35 // pred_region
          %217 = dma.done [#allocation6], 512
        $region44: #{tpu_custom_call.1} parent=35 // pred_fallthru
          _
        // Predicated region
        $region45: #{tpu_custom_call.1} parent=35 // pred_check
          %p218 = pneg %p85
        $region46: #{tpu_custom_call.1} parent=35 // pred_check_branch
          %220 = sbr.rel (%p218) target = $region48
        $region47: #{tpu_custom_call.1} parent=35 // pred_region
          %221 = dma.done [#allocation6], 512
        $region48: #{tpu_custom_call.1} parent=35 // pred_fallthru
          _
        %s222 = sand.u32 %s30, 1
        %s223 = scalar_lea.sflag [#allocation3], %s222
        %s224 = sand.u32 %s30, 1
        %s225 = smul.addr %s224, 8
        %s226 = scalar_lea.vmem [#allocation2], %s225
        %p227 = pneg %p43
        %p228 = pneg %p40
        %p229 = pneg %p64
        %p230 = pneg %p61
        %p231 = pneg %p85
        %p232 = pneg %p82
        %p233 = pneg %p106
        %p234 = pneg %p103
        %p235 = pneg %p132
        %p236 = pneg %p129
        %s237 = sand.u32 %s119, 1
        %s238 = scalar_lea.sflag [#allocation4], %s237
        %s239 = sand.u32 %s119, 1
        %s240 = smul.addr %s239, 8
        %s241 = scalar_lea.vmem [#allocation8], %s240
        %v242 = vld [vmem:[%s209] sm:$0xff]
        %vm243 = vcmask 261120
        %v244 = vsel %vm243, %v242, 0.0
        %v245 = vrot.slane %v244, 4
        %v246 = vadd.f32 %v244, %v245
        %v247 = vrot.slane %v246, 2
        %v248 = vadd.f32 %v246, %v247
        %v249 = vrot.slane %v248, 1
        %v250 = vadd.f32 %v248, %v249
        %v251 = vrcp.pop 8.0
        %v252 = vmul.f32 %v250, %v251
        %v253 = vld [vmem:[#allocation5] sm:$0xff]
        %v254 = vld [vmem:[#allocation5 + $0x8] sm:$0xff]
        %v255 = vld [vmem:[#allocation5 + $0x10] sm:$0xff]
        %v256 = vld [vmem:[#allocation5 + $0x18] sm:$0xff]
        %v258 = vsel %vm243, %v242, 0
        %260 = vmatprep.subr.mxu0 0.0
        %261 = vmatpush1.msra.mxu0 %v253
        %262 = vmatprep.subr.mxu0 0.0
        %263 = vmatpush1.msra.mxu0 %v254
        %264 = vmatprep.subr.mxu0 0.0
        %265 = vmatpush1.msra.mxu0 %v255
        %266 = vmatprep.subr.mxu0 0.0
        %267 = vmatpush1.msra.mxu0 %v256
        %268 = vmatprep.subr.mxu0 0.0
        %269 = vmatpush1.msra.mxu0 0.0
        %270 = vmatprep.subr.mxu0 0.0
        %271 = vmatpush1.msra.mxu0 0.0
        %272 = vmatprep.subr.mxu0 0.0
        %273 = vmatpush1.msra.mxu0 0.0
        %274 = vmatprep.subr.mxu0 0.0
        %275 = vmatpush1.msra.mxu0 0.0
        %276 = vmatprep.subr.mxu0 0.0
        %277 = vmatpush1.msra.mxu0 0.0
        %278 = vmatprep.subr.mxu0 0.0
        %279 = vmatpush1.msra.mxu0 0.0
        %280 = vmatprep.subr.mxu0 0.0
        %281 = vmatpush1.msra.mxu0 0.0
        %282 = vmatprep.subr.mxu0 0.0
        %283 = vmatpush1.msra.mxu0 0.0
        %284 = vmatprep.subr.mxu0 0.0
        %285 = vmatpush1.msra.mxu0 0.0
        %286 = vmatprep.subr.mxu0 0.0
        %287 = vmatpush1.msra.mxu0 0.0
        %288 = vmatprep.subr.mxu0 0.0
        %289 = vmatpush1.msra.mxu0 0.0
        %290 = vmatprep.subr.mxu0 0.0
        %291 = vmatpush1.msra.mxu0 0.0
        %292 = vmatprep.subr.mxu0 0.0
        %293 = vmatpush1.msra.mxu0 0.0
        %294 = vmatprep.subr.mxu0 0.0
        %295 = vmatpush1.msra.mxu0 0.0
        %296 = vmatprep.subr.mxu0 0.0
        %297 = vmatpush1.msra.mxu0 0.0
        %298 = vmatprep.subr.mxu0 0.0
        %299 = vmatpush1.msra.mxu0 0.0
        %300 = vmatprep.subr.mxu0 0.0
        %301 = vmatpush1.msra.mxu0 0.0
        %302 = vmatprep.subr.mxu0 0.0
        %303 = vmatpush1.msra.mxu0 0.0
        %304 = vmatprep.subr.mxu0 0.0
        %305 = vmatpush1.msra.mxu0 0.0
        %306 = vmatprep.subr.mxu0 0.0
        %307 = vmatpush1.msra.mxu0 0.0
        %308 = vmatprep.subr.mxu0 0.0
        %309 = vmatpush1.msra.mxu0 0.0
        %310 = vmatprep.subr.mxu0 0.0
        %311 = vmatpush1.msra.mxu0 0.0
        %312 = vmatprep.subr.mxu0 0.0
        %313 = vmatpush1.msra.mxu0 0.0
        %314 = vmatprep.subr.mxu0 0.0
        %315 = vmatpush1.msra.mxu0 0.0
        %316 = vmatprep.subr.mxu0 0.0
        %317 = vmatpush1.msra.mxu0 0.0
        %318 = vmatprep.subr.mxu0 0.0
        %319 = vmatpush1.msra.mxu0 0.0
        %320 = vmatprep.subr.mxu0 0.0
        %321 = vmatpush1.msra.mxu0 0.0
        %322 = vmatprep.subr.mxu0 0.0
        %323 = vmatpush1.msra.mxu0 0.0
        %324 = vmatprep.mubr.f32.mxu0 0.0
        %325 = vmatmul.mubr.f32.gmra.mrb[0].mxu0 %v258
        %v326 = vpop.f32.mrb[0].mxu0
        %v327 = vadd.f32 0.0, %v326
        %v328 = vpop.f32.mrb[0].mxu0
        %329 = vdwg.mxu0
        %v330 = vld [vmem:[#allocation7] sm:$0xff]
        %v331 = vld [vmem:[#allocation7 + $0x8] sm:$0xff]
        %v332 = vld [vmem:[#allocation7 + $0x10] sm:$0xff]
        %v333 = vld [vmem:[#allocation7 + $0x18] sm:$0xff]
        %v335 = vsel %vm243, %v252, 0
        %337 = vmatprep.subr.mxu0 0.0
        %338 = vmatpush1.msra.mxu0 %v330
        %339 = vmatprep.subr.mxu0 0.0
        %340 = vmatpush1.msra.mxu0 %v331
        %341 = vmatprep.subr.mxu0 0.0
        %342 = vmatpush1.msra.mxu0 %v332
        %343 = vmatprep.subr.mxu0 0.0
        %344 = vmatpush1.msra.mxu0 %v333
        %345 = vmatprep.subr.mxu0 0.0
        %346 = vmatpush1.msra.mxu0 0.0
        %347 = vmatprep.subr.mxu0 0.0
        %348 = vmatpush1.msra.mxu0 0.0
        %349 = vmatprep.subr.mxu0 0.0
        %350 = vmatpush1.msra.mxu0 0.0
        %351 = vmatprep.subr.mxu0 0.0
        %352 = vmatpush1.msra.mxu0 0.0
        %353 = vmatprep.subr.mxu0 0.0
        %354 = vmatpush1.msra.mxu0 0.0
        %355 = vmatprep.subr.mxu0 0.0
        %356 = vmatpush1.msra.mxu0 0.0
        %357 = vmatprep.subr.mxu0 0.0
        %358 = vmatpush1.msra.mxu0 0.0
        %359 = vmatprep.subr.mxu0 0.0
        %360 = vmatpush1.msra.mxu0 0.0
        %361 = vmatprep.subr.mxu0 0.0
        %362 = vmatpush1.msra.mxu0 0.0
        %363 = vmatprep.subr.mxu0 0.0
        %364 = vmatpush1.msra.mxu0 0.0
        %365 = vmatprep.subr.mxu0 0.0
        %366 = vmatpush1.msra.mxu0 0.0
        %367 = vmatprep.subr.mxu0 0.0
        %368 = vmatpush1.msra.mxu0 0.0
        %369 = vmatprep.subr.mxu0 0.0
        %370 = vmatpush1.msra.mxu0 0.0
        %371 = vmatprep.subr.mxu0 0.0
        %372 = vmatpush1.msra.mxu0 0.0
        %373 = vmatprep.subr.mxu0 0.0
        %374 = vmatpush1.msra.mxu0 0.0
        %375 = vmatprep.subr.mxu0 0.0
        %376 = vmatpush1.msra.mxu0 0.0
        %377 = vmatprep.subr.mxu0 0.0
        %378 = vmatpush1.msra.mxu0 0.0
        %379 = vmatprep.subr.mxu0 0.0
        %380 = vmatpush1.msra.mxu0 0.0
        %381 = vmatprep.subr.mxu0 0.0
        %382 = vmatpush1.msra.mxu0 0.0
        %383 = vmatprep.subr.mxu0 0.0
        %384 = vmatpush1.msra.mxu0 0.0
        %385 = vmatprep.subr.mxu0 0.0
        %386 = vmatpush1.msra.mxu0 0.0
        %387 = vmatprep.subr.mxu0 0.0
        %388 = vmatpush1.msra.mxu0 0.0
        %389 = vmatprep.subr.mxu0 0.0
        %390 = vmatpush1.msra.mxu0 0.0
        %391 = vmatprep.subr.mxu0 0.0
        %392 = vmatpush1.msra.mxu0 0.0
        %393 = vmatprep.subr.mxu0 0.0
        %394 = vmatpush1.msra.mxu0 0.0
        %395 = vmatprep.subr.mxu0 0.0
        %396 = vmatpush1.msra.mxu0 0.0
        %397 = vmatprep.subr.mxu0 0.0
        %398 = vmatpush1.msra.mxu0 0.0
        %399 = vmatprep.subr.mxu0 0.0
        %400 = vmatpush1.msra.mxu0 0.0
        %401 = vmatprep.mubr.f32.mxu0 0.0
        %402 = vmatmul.mubr.f32.gmra.mrb[0].mxu0 %v335
        %v403 = vpop.f32.mrb[0].mxu0
        %v404 = vadd.f32 0.0, %v403
        %v405 = vpop.f32.mrb[0].mxu0
        %406 = vdwg.mxu0
        %v407 = vld [vmem:[%s3] sm:$0x1]
        %v409 = vlaneseq
        %v410 = vshrl.u32 %v409, 7
        %v411 = vsub.s32 0, %v410
        %v412 = vrot.slane %v407, %v411
        %v414 = vadd.f32 %v327, %v412
        %v415 = vlaneseq
        %v416 = vshrl.u32 %v415, 7
        %v417 = vsub.s32 0, %v416
        %v418 = vrot.slane %v404, %v417
        %v419 = vsub.f32 %v414, %v418
        %420 = vst.msk [vmem:[%s241] sm:$0xff] %vm243, %v419
        %s421 = sand.u32 %s119, 1
        %s422 = scalar_lea.sflag [#allocation4], %s421
        %s423 = sand.u32 %s119, 1
        %s424 = smul.addr %s423, 8
        %s425 = scalar_lea.vmem [#allocation8], %s424
        // Predicated region
        $region49: #{tpu_custom_call.1} parent=35 // pred_check
          %p426 = pneg %p129
        $region50: #{tpu_custom_call.1} parent=35 // pred_check_branch
          %428 = sbr.rel (%p426) target = $region52
        $region51: #{tpu_custom_call.1} parent=35 // pred_region
          %s430 = ssub.s32 128, 128
          %431 = vsyncadd %s422, %s430
          %s432 = smul.addr %s22, 128
          %s433 = scalar_lea.hbm %s4, %s432
          %s435 = sshll.u32 %s425, 4
          %s436 = int_to_ptr.vmem [resolvable:$true] %s435
          %438 = dma.vmem_to_hbm [thread:$0]  %s436, 128, %s433, %s422
        $region52: #{tpu_custom_call.1} parent=35 // pred_fallthru
          _
      $region36: #{tpu_custom_call.1} parent=5 // pred_fallthru
        _
      %p439 = scmp.le.s32.totalorder 2, %s17
      // Predicated region
      $region53: #{tpu_custom_call.1} parent=5 // pred_check
        %p440 = pneg %p439
      $region54: #{tpu_custom_call.1} parent=5 // pred_check_branch
        %442 = sbr.rel (%p440) target = $region56
      $region55: #{tpu_custom_call.1} parent=5 // pred_region
        %s443 = ssub.s32 %s17, 2
        // Predicated region
        $region57: #{tpu_custom_call.1} parent=55 // pred_check
          %p444 = pneg %p135
        $region58: #{tpu_custom_call.1} parent=55 // pred_check_branch
          %446 = sbr.rel (%p444) target = $region60
        $region59: #{tpu_custom_call.1} parent=55 // pred_region
          %s447 = sand.u32 %s120, 1
          %s448 = scalar_lea.sflag [#allocation4], %s447
          %s449 = sand.u32 %s120, 1
          %s450 = smul.addr %s449, 8
          %s451 = scalar_lea.vmem [#allocation8], %s450
          %452 = dma.done %s448, 128
        $region60: #{tpu_custom_call.1} parent=55 // pred_fallthru
          _
      $region56: #{tpu_custom_call.1} parent=5 // pred_fallthru
        _
    $region6: #{tpu_custom_call.1} parent=1 // loop_footer
      %s21 = sadd.s32 1, %s17
    $region7: #{tpu_custom_call.1} parent=1 // loop_footer_branch
      %16 = sbr.rel target = $region3
    $region8: #{tpu_custom_call.1} parent=1 // loop_exit
      _
    %453 = vsyncpa [#allocation3], 1
    %s454 = scalar_lea.sflag [#allocation3], 1
    %455 = vsyncpa %s454, 1
    %456 = vsyncpa [#allocation6], 1
    %457 = vsyncpa [#allocation4], 1
    %s458 = scalar_lea.sflag [#allocation4], 1
    %459 = vsyncpa %s458, 1

</llo_original>
